<compile_context>
chip_gen: v7x
topology: tpu7x:2x2x1
jax: 0.10.0
libtpu: 0.0.40
codegen_flags: <defaults>
</compile_context>

<pallas_src>
import math
import functools

import jax
import jax.numpy as jnp
from jax.experimental import pallas as pl
from jax.experimental.pallas import tpu as pltpu


VMEM_LIMIT = 32 * 1024 * 1024  # safe on v5e / v6e / v7x scoped VMEM


# ---------------------------------------------------------------------------
# helpers
# ---------------------------------------------------------------------------
def _tile(dim, pref, align, min_blocks=1):
    """Largest block <= pref that divides `dim`, is a multiple of `align`,
    and (when possible) leaves at least `min_blocks` blocks so both v7x
    TensorCores get work.  Falls back to the full dim (always legal)."""
    cap = min(pref, dim)
    if min_blocks > 1 and dim >= align * min_blocks:
        cap = min(cap, dim // min_blocks)
    t = (cap // align) * align
    while t >= align:
        if dim % t == 0:
            return t
        t -= align
    return dim


def _gelu_tanh(x):
    # TODO(synk): PyTorch F.gelu defaults to the exact erf form; tanh approx
    # used here (single EUP tanh), ~1e-3 level difference.
    c = 0.7978845608028654  # sqrt(2/pi)
    return 0.5 * x * (1.0 + jnp.tanh(c * (x + 0.044715 * (x * x * x))))


def _layernorm_f32(x, g, b, eps=1e-5):
    mu = jnp.mean(x, axis=-1, keepdims=True)
    var = jnp.mean((x - mu) ** 2, axis=-1, keepdims=True)
    return (x - mu) * jax.lax.rsqrt(var + eps) * g + b


# ---------------------------------------------------------------------------
# Pallas kernels
# ---------------------------------------------------------------------------
def matmul_kernel(x_ref, w_ref, *rest, activation, has_bias):
    """out = act(x @ w [+ b]); grid (M/tm, N/tn, K/tk), f32 accumulator."""
    if has_bias:
        b_ref, o_ref, acc_ref = rest
    else:
        o_ref, acc_ref = rest
        b_ref = None

    @pl.when(pl.program_id(2) == 0)
    def _():
        acc_ref[...] = jnp.zeros_like(acc_ref)

    acc_ref[...] += jnp.dot(x_ref[...], w_ref[...],
                            preferred_element_type=jnp.float32)

    @pl.when(pl.program_id(2) == pl.num_programs(2) - 1)
    def _():
        r = acc_ref[...]
        if has_bias:
            r = r + b_ref[...]
        if activation == "gelu":
            r = _gelu_tanh(r)
        o_ref[...] = r.astype(o_ref.dtype)


def matmul_residual_ln_kernel(x_ref, w_ref, b_ref, r_ref, *rest, n_ln):
    """out = LN_n(...LN_1(x @ w + b + resid)); grid (M/tm, K/tk), N untiled.

    Fuses residual-add + LayerNorm (and optionally a second LN, e.g. ln_f for
    the last layer) into the matmul finalize -- no standalone LN round trip.
    """
    ln_refs = rest[:2 * n_ln]
    o_ref, acc_ref = rest[2 * n_ln:]

    @pl.when(pl.program_id(1) == 0)
    def _():
        acc_ref[...] = jnp.zeros_like(acc_ref)

    acc_ref[...] += jnp.dot(x_ref[...], w_ref[...],
                            preferred_element_type=jnp.float32)

    @pl.when(pl.program_id(1) == pl.num_programs(1) - 1)
    def _():
        t = acc_ref[...] + b_ref[...] + r_ref[...].astype(jnp.float32)
        for li in range(n_ln):
            t = _layernorm_f32(t, ln_refs[2 * li][...], ln_refs[2 * li + 1][...])
        o_ref[...] = t.astype(o_ref.dtype)


def attention_kernel(qkv_ref, *rest, H, hd, has_mask):
    """Per-batch multi-head attention reading the fused QKV buffer directly.

    qkv_ref is (S, 3*D) bf16 (scale already folded into W_q); output (S, D).
    Normalization is applied after the PV matmul (S*hd instead of S*S muls).
    """
    if has_mask:
        mask_ref, o_ref = rest
        mask = mask_ref[...]
    else:
        (o_ref,) = rest
        mask = None

    qkv = qkv_ref[...]                                   # (S, 3D) bf16
    D = H * hd
    outs = []
    # TODO(synk): for hd that is a multiple of 128 the head axis should be a
    # grid axis with column-block indexing; for long S this should become a
    # flash-style kernel with a KV-tile grid axis (online softmax) -- the full
    # SxS score tensor is the limiting VMEM term on v7x (64 MiB).
    for h in range(H):
        q = qkv[:, h * hd:(h + 1) * hd]
        k = qkv[:, D + h * hd:D + (h + 1) * hd]
        v = qkv[:, 2 * D + h * hd:2 * D + (h + 1) * hd]
        s = jax.lax.dot_general(q, k, (((1,), (1,)), ((), ())),
                                preferred_element_type=jnp.float32)   # (S, S)
        if mask is not None:
            s = s + mask
        m = jnp.max(s, axis=-1, keepdims=True)
        p = jnp.exp(s - m)
        denom = jnp.sum(p, axis=-1, keepdims=True)
        o = jnp.dot(p.astype(jnp.bfloat16), v,
                    preferred_element_type=jnp.float32)               # (S, hd)
        outs.append(o * pl.reciprocal(denom, approx=True))
    # single lane-dense store of the full (S, D) row block
    o_ref[...] = jnp.concatenate(outs, axis=-1).astype(o_ref.dtype)


# ---------------------------------------------------------------------------
# pallas_call wrappers (gridded / pipelined)
# ---------------------------------------------------------------------------
def matmul(x, w, b=None, activation=None, *, out_dtype=jnp.bfloat16,
           tm=512, tn=256, tk=512):
    M, K = x.shape
    _, N = w.shape
    tm = _tile(M, tm, 8, min_blocks=2)
    tn = _tile(N, tn, 128)
    tk = _tile(K, tk, 128)
    has_bias = b is not None
    kernel = functools.partial(matmul_kernel, activation=activation,
                               has_bias=has_bias)
    in_specs = [pl.BlockSpec((tm, tk), lambda i, j, k: (i, k)),
                pl.BlockSpec((tk, tn), lambda i, j, k: (k, j))]
    args = [x, w]
    if has_bias:
        in_specs.append(pl.BlockSpec((1, tn), lambda i, j, k: (0, j)))
        args.append(b)
    return pl.pallas_call(
        kernel,
        grid=(M // tm, N // tn, K // tk),
        in_specs=in_specs,
        out_specs=pl.BlockSpec((tm, tn), lambda i, j, k: (i, j)),
        out_shape=jax.ShapeDtypeStruct((M, N), out_dtype),
        scratch_shapes=[pltpu.VMEM((tm, tn), jnp.float32)],
        compiler_params=pltpu.CompilerParams(
            dimension_semantics=("parallel", "parallel", "arbitrary"),
            vmem_limit_bytes=VMEM_LIMIT),
    )(*args)


def matmul_residual_ln(x, w, b, resid, ln_params, *, tm=256, tk=512):
    """act-stream matmul with residual+LayerNorm fused into the finalize.
    N (= D) is untiled so the full row is available for the LN statistics;
    fine for D up to a few K on all generations."""
    M, K = x.shape
    _, N = w.shape
    tm = _tile(M, tm, 8, min_blocks=2)
    tk = _tile(K, tk, 128)
    n_ln = len(ln_params) // 2
    kernel = functools.partial(matmul_residual_ln_kernel, n_ln=n_ln)
    row_spec = pl.BlockSpec((1, N), lambda i, k: (0, 0))
    in_specs = [pl.BlockSpec((tm, tk), lambda i, k: (i, k)),
                pl.BlockSpec((tk, N), lambda i, k: (k, 0)),
                row_spec,
                pl.BlockSpec((tm, N), lambda i, k: (i, 0))]
    in_specs += [row_spec] * (2 * n_ln)
    return pl.pallas_call(
        kernel,
        grid=(M // tm, K // tk),
        in_specs=in_specs,
        out_specs=pl.BlockSpec((tm, N), lambda i, k: (i, 0)),
        out_shape=jax.ShapeDtypeStruct((M, N), jnp.bfloat16),
        scratch_shapes=[pltpu.VMEM((tm, N), jnp.float32)],
        compiler_params=pltpu.CompilerParams(
            dimension_semantics=("parallel", "arbitrary"),
            vmem_limit_bytes=VMEM_LIMIT),
    )(x, w, b, resid, *ln_params)


def attention(qkv, mask, *, H):
    """qkv: (B, S, 3D) bf16 (straight reshape of the QKV matmul output)."""
    B, S, threeD = qkv.shape
    D = threeD // 3
    hd = D // H
    has_mask = mask is not None
    kernel = functools.partial(attention_kernel, H=H, hd=hd, has_mask=has_mask)
    in_specs = [pl.BlockSpec((None, S, threeD), lambda b: (b, 0, 0))]
    args = [qkv]
    if has_mask:
        in_specs.append(pl.BlockSpec((S, S), lambda b: (0, 0)))
        args.append(mask)
    return pl.pallas_call(
        kernel,
        grid=(B,),
        in_specs=in_specs,
        out_specs=pl.BlockSpec((None, S, D), lambda b: (b, 0, 0)),
        out_shape=jax.ShapeDtypeStruct((B, S, D), jnp.bfloat16),
        compiler_params=pltpu.CompilerParams(
            dimension_semantics=("parallel",),
            vmem_limit_bytes=VMEM_LIMIT),
    )(*args)


# ---------------------------------------------------------------------------
# Transformer block / full model (JAX glue around the Pallas kernels)
# ---------------------------------------------------------------------------
def transformer_block(x_flat, mask, p, *, B, S, H, final_ln=None):
    """One TransformerBlock on batch-major bf16 (B*S, D) rows."""
    D = x_flat.shape[-1]

    # fused QKV projection (1/sqrt(hd) pre-folded into W_q / b_q at init)
    qkv = matmul(x_flat, p["w_qkv"], p["b_qkv"])                 # (B*S, 3D) bf16

    # attention reads the QKV buffer directly -- no head-major transposes
    attn = attention(qkv.reshape(B, S, 3 * D), mask, H=H)        # (B, S, D) bf16
    attn = attn.reshape(B * S, D)

    # out-proj fused with residual-add + LayerNorm1
    y = matmul_residual_ln(attn, p["w_o"], p["b_o"], x_flat,
                           [p["ln1_g"], p["ln1_b"]])             # (B*S, D) bf16

    # FFN: up-proj + GELU, then down-proj fused with residual + LN2 (+ ln_f)
    h1 = matmul(y, p["w1"], p["b1"], activation="gelu")          # (B*S, 4D) bf16
    ln_list = [p["ln2_g"], p["ln2_b"]]
    if final_ln is not None:
        ln_list += list(final_ln)                                # fold ln_f in
    return matmul_residual_ln(h1, p["w2"], p["b2"], y, ln_list)  # (B*S, D) bf16


def llm_forward(token_ids, params, pe, *, nhead, mask=None):
    emb, head_w, lnf_g, lnf_b, layers = params
    assert len(layers) >= 1
    B, S = token_ids.shape
    D = emb.shape[1]

    # token embedding * sqrt(d_model) + positional encoding (dropout = identity)
    # TODO(synk): embedding gather stays in XLA (data-dependent row gather).
    x = emb[token_ids] * math.sqrt(D) + pe[None, :S, :]
    x_flat = x.reshape(B * S, D).astype(jnp.bfloat16)

    if mask is not None:                                # forward() default: None
        mask = mask.astype(jnp.float32)

    n = len(layers)
    for li, layer_params in enumerate(layers):
        final_ln = (lnf_g, lnf_b) if li == n - 1 else None   # ln_f fused here
        x_flat = transformer_block(x_flat, mask, layer_params,
                                   B=B, S=S, H=nhead, final_ln=final_ln)

    # vocab head: plain matmul, no bias, f32 logits
    # TODO(synk): on v7x the head weights could be fp8 with per-channel scales.
    logits_flat = matmul(x_flat, head_w, b=None, out_dtype=jnp.float32)
    return logits_flat.reshape(B, S, -1)


# ---------------------------------------------------------------------------
# Parameters / positional encoding
# ---------------------------------------------------------------------------
def make_positional_encoding(max_len, d_model):
    position = jnp.arange(max_len, dtype=jnp.float32)[:, None]
    div_term = jnp.exp(jnp.arange(0, d_model, 2, dtype=jnp.float32)
                       * (-math.log(10000.0) / d_model))
    pe = jnp.zeros((max_len, d_model), jnp.float32)
    pe = pe.at[:, 0::2].set(jnp.sin(position * div_term))
    pe = pe.at[:, 1::2].set(jnp.cos(position * div_term))
    return pe


def init_llm_params(key, vocab_size, d_model, nhead, num_layers):
    keys = jax.random.split(key, 2 + num_layers)
    scale = 0.02
    hd = d_model // nhead
    q_scale = 1.0 / math.sqrt(hd)          # folded into W_q / b_q (attention scale)

    emb = jax.random.normal(keys[0], (vocab_size, d_model), jnp.float32) * scale
    # MXU weights pre-cast to bf16 (halves DMA bytes + VMEM per tile)
    head_w = (jax.random.normal(keys[1], (d_model, vocab_size), jnp.float32)
              * scale).astype(jnp.bfloat16)
    lnf_g = jnp.ones((1, d_model), jnp.float32)
    lnf_b = jnp.zeros((1, d_model), jnp.float32)

    layers = []
    for l in range(num_layers):
        lk = jax.random.split(keys[2 + l], 6)
        wq = jax.random.normal(lk[0], (d_model, d_model), jnp.float32) * scale
        wk = jax.random.normal(lk[1], (d_model, d_model), jnp.float32) * scale
        wv = jax.random.normal(lk[2], (d_model, d_model), jnp.float32) * scale
        wo = jax.random.normal(lk[3], (d_model, d_model), jnp.float32) * scale
        w1 = jax.random.normal(lk[4], (d_model, 4 * d_model), jnp.float32) * scale
        w2 = jax.random.normal(lk[5], (4 * d_model, d_model), jnp.float32) * scale
        b_qkv = jnp.zeros((1, 3 * d_model), jnp.float32)
        b_qkv = b_qkv.at[:, :d_model].multiply(q_scale)   # scale q-bias slice too
        p = dict(
            w_qkv=jnp.concatenate([wq * q_scale, wk, wv], axis=1).astype(jnp.bfloat16),
            b_qkv=b_qkv,
            w_o=wo.astype(jnp.bfloat16),
            b_o=jnp.zeros((1, d_model), jnp.float32),
            w1=w1.astype(jnp.bfloat16),
            b1=jnp.zeros((1, 4 * d_model), jnp.float32),
            w2=w2.astype(jnp.bfloat16),
            b2=jnp.zeros((1, d_model), jnp.float32),
            ln1_g=jnp.ones((1, d_model), jnp.float32),
            ln1_b=jnp.zeros((1, d_model), jnp.float32),
            ln2_g=jnp.ones((1, d_model), jnp.float32),
            ln2_b=jnp.zeros((1, d_model), jnp.float32),
        )
        layers.append(p)
    return emb, head_w, lnf_g, lnf_b, layers


# ---------------------------------------------------------------------------
if __name__ == "__main__":
    vocab_size = 64
    d_model = 32
    nhead = 4
    num_layers = 2
    max_seq_len = 16
    B, S = 2, 8

    key = jax.random.PRNGKey(0)
    pkey, tkey = jax.random.split(key)
    params = init_llm_params(pkey, vocab_size, d_model, nhead, num_layers)
    pe = make_positional_encoding(max_seq_len, d_model)

    token_ids = jax.random.randint(tkey, (B, S), 0, vocab_size, dtype=jnp.int32)

    logits = llm_forward(token_ids, params, pe, nhead=nhead, mask=None)
    logits = jax.block_until_ready(logits)

    assert logits.shape == (B, S, vocab_size), logits.shape
    assert bool(jnp.all(jnp.isfinite(logits)))
    print("KERNEL_OK")
</pallas_src>

<mosaic_0001>
module attributes {stable_mosaic.version = 11 : i64} {
  func.func @matmul_kernel(%arg0: i32, %arg1: i32, %arg2: i32, %arg3: memref<8x32xbf16, #tpu.memory_space<vmem>>, %arg4: memref<32x96xbf16, #tpu.memory_space<vmem>>, %arg5: memref<1x96xf32, #tpu.memory_space<vmem>>, %arg6: memref<8x96xbf16, #tpu.memory_space<vmem>>, %arg7: memref<8x96xf32, #tpu.memory_space<vmem>>) attributes {dimension_semantics = [#tpu.dimension_semantics<parallel>, #tpu.dimension_semantics<parallel>, #tpu.dimension_semantics<arbitrary>], iteration_bounds = array<i64: 2, 1, 1>, scalar_prefetch = 0 : i64, scratch_operands = 1 : i64, tpu.core_type = #tpu.core_type<tc>, window_params = [{transform_indices = @transform_0, window_bounds = array<i64: 8, 32>}, {transform_indices = @transform_1, window_bounds = array<i64: 32, 96>}, {transform_indices = @transform_2, window_bounds = array<i64: 1, 96>}, {transform_indices = @transform_3, window_bounds = array<i64: 8, 96>}]} {
    %c0_i32 = arith.constant 0 : i32
    %0 = arith.cmpi eq, %arg2, %c0_i32 : i32
    %1 = arith.extui %0 : i1 to i32
    %c0_i32_0 = arith.constant 0 : i32
    %2 = arith.cmpi ne, %1, %c0_i32_0 : i32
    scf.if %2 {
      %cst_10 = arith.constant 0.000000e+00 : f32
      %12 = vector.broadcast %cst_10 : f32 to vector<8x96xf32>
      %c0_11 = arith.constant 0 : index
      %c0_12 = arith.constant 0 : index
      %13 = vector.load %arg7[%c0_11, %c0_12] : memref<8x96xf32, #tpu.memory_space<vmem>>, vector<8x96xf32>
      tpu.vector_store %arg7[%c0_11, %c0_12], %12 {strides = array<i32>} : memref<8x96xf32, #tpu.memory_space<vmem>>, vector<8x96xf32>,
    } else {
    }
    %c0 = arith.constant 0 : index
    %c0_1 = arith.constant 0 : index
    %3 = vector.load %arg7[%c0, %c0_1] : memref<8x96xf32, #tpu.memory_space<vmem>>, vector<8x96xf32>
    %c0_2 = arith.constant 0 : index
    %c0_3 = arith.constant 0 : index
    %4 = vector.load %arg3[%c0_2, %c0_3] : memref<8x32xbf16, #tpu.memory_space<vmem>>, vector<8x32xbf16>
    %c0_4 = arith.constant 0 : index
    %c0_5 = arith.constant 0 : index
    %5 = vector.load %arg4[%c0_4, %c0_5] : memref<32x96xbf16, #tpu.memory_space<vmem>>, vector<32x96xbf16>
    %cst = arith.constant dense<0.000000e+00> : vector<8x96xf32>
    %6 = tpu.matmul %4, %5, %cst {dimension_numbers = #tpu.dot_dimension_numbers<[1], [0], [0], [1], [0, 0, 1, 1], [], []>} : vector<8x32xbf16>, vector<32x96xbf16>, vector<8x96xf32> -> vector<8x96xf32>
    %7 = arith.addf %3, %6 : vector<8x96xf32>
    %c0_6 = arith.constant 0 : index
    %c0_7 = arith.constant 0 : index
    %8 = vector.load %arg7[%c0_6, %c0_7] : memref<8x96xf32, #tpu.memory_space<vmem>>, vector<8x96xf32>
    tpu.vector_store %arg7[%c0_6, %c0_7], %7 {strides = array<i32>} : memref<8x96xf32, #tpu.memory_space<vmem>>, vector<8x96xf32>,
    %c0_i32_8 = arith.constant 0 : i32
    %9 = arith.cmpi eq, %arg2, %c0_i32_8 : i32
    %10 = arith.extui %9 : i1 to i32
    %c0_i32_9 = arith.constant 0 : i32
    %11 = arith.cmpi ne, %10, %c0_i32_9 : i32
    scf.if %11 {
      %c0_10 = arith.constant 0 : index
      %c0_11 = arith.constant 0 : index
      %12 = vector.load %arg7[%c0_10, %c0_11] : memref<8x96xf32, #tpu.memory_space<vmem>>, vector<8x96xf32>
      %c0_12 = arith.constant 0 : index
      %c0_13 = arith.constant 0 : index
      %13 = vector.load %arg5[%c0_12, %c0_13] : memref<1x96xf32, #tpu.memory_space<vmem>>, vector<1x96xf32>
      %14 = vector.broadcast %13 : vector<1x96xf32> to vector<8x96xf32>
      %15 = arith.addf %12, %14 : vector<8x96xf32>
      %16 = arith.truncf %15 : vector<8x96xf32> to vector<8x96xbf16>
      %c0_14 = arith.constant 0 : index
      %c0_15 = arith.constant 0 : index
      %17 = vector.load %arg6[%c0_14, %c0_15] : memref<8x96xbf16, #tpu.memory_space<vmem>>, vector<8x96xbf16>
      tpu.vector_store %arg6[%c0_14, %c0_15], %16 {strides = array<i32>} : memref<8x96xbf16, #tpu.memory_space<vmem>>, vector<8x96xbf16>,
    } else {
    }
    return
  }
  func.func @transform_0(%arg0: i32, %arg1: i32, %arg2: i32) -> (i32, i32) {
    %c0_i32 = arith.constant 0 : i32
    return %arg0, %arg2 : i32, i32
  }
  func.func @transform_1(%arg0: i32, %arg1: i32, %arg2: i32) -> (i32, i32) {
    %c0_i32 = arith.constant 0 : i32
    return %arg2, %arg1 : i32, i32
  }
  func.func @transform_2(%arg0: i32, %arg1: i32, %arg2: i32) -> (i32, i32) {
    %c0_i32 = arith.constant 0 : i32
    %c0_i32_0 = arith.constant 0 : i32
    return %c0_i32, %arg1 : i32, i32
  }
  func.func @transform_3(%arg0: i32, %arg1: i32, %arg2: i32) -> (i32, i32) {
    %c0_i32 = arith.constant 0 : i32
    return %arg0, %arg1 : i32, i32
  }
}

</mosaic_0001>

<llo_original>
// kernel: tpu_custom_call.1
$region0: #{tpu_custom_call.1}
  #allocation0 [shape = 'u32[]', space=smem, size = 0x4, offset = 0x4, fixed_abs, tag = 'smem constant byte address 0x4 - core index']
  #allocation1 [shape = 'u32[144,128]{1,0:T(1,128)}', space=vmem, size = 0x12000, scoped, tag = 'internal scratch']
  #allocation2 [shape = 'f32[8,96]{1,0:T(8,128)}', space=vmem, size = 0x1000, scoped, tag = 'scratch operand']
  %s0 = inlined_call_operand.hbm [shape: bf16[16,32], index: 0, kind: input, shape index: {}]
  %s1 = inlined_call_operand.hbm [shape: bf16[32,96], index: 1, kind: input, shape index: {}]
  %s2 = inlined_call_operand.vmem [shape: f32[1,96], index: 2, kind: input, shape index: {}]
  %s3 = inlined_call_operand.hbm [shape: bf16[16,96], index: 3, kind: output, shape index: {}]
  %s4 = sld [smem:[#allocation0]]
  $region61: #{tpu_custom_call.1} parent=0
    _
  %s6 = ssub.s32 1, %s4
  %s7 = scalar_select 0, %s6, %s4
  $region1: #{tpu_custom_call.1} parent=0
    #allocation3 [shape = 'u8[4096]{0}', space=vmem, size = 0x1000, scoped, tag = 'input window, operand 0']
    #allocation4 [shape = 's32[2]{0}', space=sflag, size = 0x8, scoped, tag = 'scoped memory for tpu_custom_call.1']
    #allocation5 [shape = 's32[2]{0}', space=sflag, size = 0x8, scoped, tag = 'scoped memory for tpu_custom_call.1']
    #allocation6 [shape = 'u8[8192]{0}', space=vmem, size = 0x2000, scoped, tag = 'input window, operand 1, single buffered']
    #allocation7 [shape = 's32[1]{0}', space=sflag, size = 0x4, scoped, tag = 'scoped memory for tpu_custom_call.1']
    #allocation8 [shape = 'u8[4096]{0}', space=vmem, size = 0x1000, scoped, tag = 'output window, operand 0']
    %8 = vsyncpa [#allocation4], 0
    %s9 = scalar_lea.sflag [#allocation4], 1
    %10 = vsyncpa %s9, 0
    %11 = vsyncpa [#allocation7], 0
    %12 = vsyncpa [#allocation5], 0
    %s13 = scalar_lea.sflag [#allocation5], 1
    %14 = vsyncpa %s13, 0
    loop: start=0, step=1, limit=4
    $region2: #{tpu_custom_call.1} parent=1 // loop_pre_header
      _
    $region3: #{tpu_custom_call.1} parent=1 // loop_header
      %s16 = sphi 0, %s20
      %p17 = scmp.ge.s32.totalorder %s16, 4
      %s23 = sphi 0, %s42
      %s24 = sphi 0, %s38
      %s25 = sphi 0, %s34
      %s26 = sphi 0, %s23
      %s27 = sphi 0, %s24
      %s28 = sphi 0, %s25
      %s29 = sphi 0, %s26
      %s30 = sphi 0, %s27
      %s31 = sphi 0, %s28
      %s47 = sphi 0, %s49
      %s50 = sphi 0, %s47
      %s51 = sphi 0, %s50
      %s67 = sphi 0, %s51
      %s75 = sphi 0, %s77
      %s78 = sphi 0, %s75
      %s79 = sphi 0, %s78
      %s95 = sphi 0, %s79
      %s101 = sphi 0, %s103
      %s104 = sphi 0, %s101
      %s105 = sphi 0, %s104
      %s121 = sphi 0, %s105
      %s129 = sphi 0, %s131
      %s132 = sphi 0, %s129
      %s133 = sphi 0, %s132
      %s149 = sphi 0, %s133
    $region4: #{tpu_custom_call.1} parent=1 // loop_header_branch
      %19 = sbr.rel (%p17) target = $region8
    $region5: #{tpu_custom_call.1} parent=1 // loop_body
      %s21 = ssub.s32 %s16, 1
      %s22 = ssub.s32 %s16, 2
      %s32 = sadd.s32 1, %s25
      %p33 = scmp.ge.s32.totalorder %s32, 1
      %s34 = scalar_select %p33, 0, %s32
      %s35 = sadd.s32 1, %s24
      %s36 = scalar_select %p33, %s35, %s24
      %p37 = scmp.ge.s32.totalorder %s36, 1
      %s38 = scalar_select %p37, 0, %s36
      %s39 = sadd.s32 1, %s23
      %s40 = scalar_select %p37, %s39, %s23
      %p41 = scmp.ge.s32.totalorder %s40, 2
      %s42 = scalar_select %p41, 0, %s40
      %s43 = ssub.s32 %s23, %s42
      %s44 = ssub.s32 %s25, %s34
      %s45 = sor.u32 %s43, %s44
      %p46 = scmp.eq.s32.totalorder %s45, 0
      %s48 = sadd.s32 %s47, 1
      %s49 = scalar_select %p46, %s47, %s48
      %p52 = pneg %p46
      %p53 = scmp.eq.s32.totalorder %s16, 1
      %p54 = por %p52, %p53
      %p55 = scmp.ne.s32.totalorder %s47, %s50
      %p56 = scmp.eq.s32.totalorder %s16, 0
      %p57 = por %p55, %p56
      %p58 = scmp.ne.s32.totalorder %s47, %s50
      %p59 = scmp.eq.s32.totalorder %s21, 1
      %p60 = por %p58, %p59
      %p61 = scmp.ne.s32.totalorder %s50, %s51
      %p62 = scmp.eq.s32.totalorder %s21, 0
      %p63 = por %p61, %p62
      %p64 = scmp.ne.s32.totalorder %s50, %s51
      %p65 = scmp.eq.s32.totalorder %s22, 1
      %p66 = por %p64, %p65
      %p68 = scmp.ne.s32.totalorder %s51, %s67
      %p69 = scmp.eq.s32.totalorder %s22, 0
      %p70 = por %p68, %p69
      %s71 = ssub.s32 %s25, %s34
      %s72 = ssub.s32 %s24, %s38
      %s73 = sor.u32 %s71, %s72
      %p74 = scmp.eq.s32.totalorder %s73, 0
      %s76 = sadd.s32 %s75, 1
      %s77 = scalar_select %p74, %s75, %s76
      %p80 = pneg %p74
      %p81 = scmp.eq.s32.totalorder %s16, 1
      %p82 = por %p80, %p81
      %p83 = scmp.ne.s32.totalorder %s75, %s78
      %p84 = scmp.eq.s32.totalorder %s16, 0
      %p85 = por %p83, %p84
      %p86 = scmp.ne.s32.totalorder %s75, %s78
      %p87 = scmp.eq.s32.totalorder %s21, 1
      %p88 = por %p86, %p87
      %p89 = scmp.ne.s32.totalorder %s78, %s79
      %p90 = scmp.eq.s32.totalorder %s21, 0
      %p91 = por %p89, %p90
      %p92 = scmp.ne.s32.totalorder %s78, %s79
      %p93 = scmp.eq.s32.totalorder %s22, 1
      %p94 = por %p92, %p93
      %p96 = scmp.ne.s32.totalorder %s79, %s95
      %p97 = scmp.eq.s32.totalorder %s22, 0
      %p98 = por %p96, %p97
      %s99 = ssub.s32 %s24, %s38
      %p100 = scmp.eq.s32.totalorder %s99, 0
      %s102 = sadd.s32 %s101, 1
      %s103 = scalar_select %p100, %s101, %s102
      %p106 = pneg %p100
      %p107 = scmp.eq.s32.totalorder %s16, 1
      %p108 = por %p106, %p107
      %p109 = scmp.ne.s32.totalorder %s101, %s104
      %p110 = scmp.eq.s32.totalorder %s16, 0
      %p111 = por %p109, %p110
      %p112 = scmp.ne.s32.totalorder %s101, %s104
      %p113 = scmp.eq.s32.totalorder %s21, 1
      %p114 = por %p112, %p113
      %p115 = scmp.ne.s32.totalorder %s104, %s105
      %p116 = scmp.eq.s32.totalorder %s21, 0
      %p117 = por %p115, %p116
      %p118 = scmp.ne.s32.totalorder %s104, %s105
      %p119 = scmp.eq.s32.totalorder %s22, 1
      %p120 = por %p118, %p119
      %p122 = scmp.ne.s32.totalorder %s105, %s121
      %p123 = scmp.eq.s32.totalorder %s22, 0
      %p124 = por %p122, %p123
      %s125 = ssub.s32 %s23, %s42
      %s126 = ssub.s32 %s24, %s38
      %s127 = sor.u32 %s125, %s126
      %p128 = scmp.eq.s32.totalorder %s127, 0
      %s130 = sadd.s32 %s129, 1
      %s131 = scalar_select %p128, %s129, %s130
      %p134 = pneg %p128
      %p135 = scmp.eq.s32.totalorder %s16, 1
      %p136 = por %p134, %p135
      %p137 = scmp.ne.s32.totalorder %s129, %s132
      %p138 = scmp.eq.s32.totalorder %s16, 0
      %p139 = por %p137, %p138
      %p140 = scmp.ne.s32.totalorder %s129, %s132
      %p141 = scmp.eq.s32.totalorder %s21, 1
      %p142 = por %p140, %p141
      %p143 = scmp.ne.s32.totalorder %s132, %s133
      %p144 = scmp.eq.s32.totalorder %s21, 0
      %p145 = por %p143, %p144
      %p146 = scmp.ne.s32.totalorder %s132, %s133
      %p147 = scmp.eq.s32.totalorder %s22, 1
      %p148 = por %p146, %p147
      %p150 = scmp.ne.s32.totalorder %s133, %s149
      %p151 = scmp.eq.s32.totalorder %s22, 0
      %p152 = por %p150, %p151
      %p153 = scmp.le.s32.totalorder 1, %s16
      %p154 = scmp.lt.s32.totalorder %s16, 3
      %p155 = pnand %p153, %p154
      %p156 = pneg %p155
      // Predicated region
      $region9: #{tpu_custom_call.1} parent=5 // pred_check
        _
      $region10: #{tpu_custom_call.1} parent=5 // pred_check_branch
        %158 = sbr.rel (%p155) target = $region12
      $region11: #{tpu_custom_call.1} parent=5 // pred_region
        %s159 = ssub.s32 %s16, 1
        // Predicated region
        $region13: #{tpu_custom_call.1} parent=11 // pred_check
          %p160 = pneg %p91
        $region14: #{tpu_custom_call.1} parent=11 // pred_check_branch
          %162 = sbr.rel (%p160) target = $region16
        $region15: #{tpu_custom_call.1} parent=11 // pred_region
          %s163 = smul.u32 4, %s28
          %s165 = ssub.s32 256, 256
          %166 = vsyncadd [#allocation7], %s165
          %s167 = sadd.s32 %s27, %s163
          %s168 = smul.addr %s167, 64
          %s169 = scalar_lea.hbm %s1, %s168
          %s170 = sshll.u32 [#allocation6], 4
          %s171 = int_to_ptr.vmem [resolvable:$true] %s170
          %176 = dma.hbm_to_vmem [thread:$0]  %s169, 256, %s171, [#allocation7], 64, 64, 4
        $region16: #{tpu_custom_call.1} parent=11 // pred_fallthru
          _
        // Predicated region
        $region17: #{tpu_custom_call.1} parent=11 // pred_check
          %p177 = pneg %p117
        $region18: #{tpu_custom_call.1} parent=11 // pred_check_branch
          %179 = sbr.rel (%p177) target = $region20
        $region19: #{tpu_custom_call.1} parent=11 // pred_region
          %p180 = scmp.lt.s32.totalorder %s27, 0
          %s181 = scalar_select %p180, %s27, 0
          %s182 = scalar_lea.vmem %s2, %s181
        $region20: #{tpu_custom_call.1} parent=11 // pred_fallthru
          _
      $region12: #{tpu_custom_call.1} parent=5 // pred_fallthru
        _
      %p183 = scmp.lt.s32.totalorder %s16, 2
      // Predicated region
      $region21: #{tpu_custom_call.1} parent=5 // pred_check
        %p184 = pneg %p183
      $region22: #{tpu_custom_call.1} parent=5 // pred_check_branch
        %186 = sbr.rel (%p184) target = $region24
      $region23: #{tpu_custom_call.1} parent=5 // pred_region
        // Predicated region
        $region25: #{tpu_custom_call.1} parent=23 // pred_check
          %p187 = pneg %p57
        $region26: #{tpu_custom_call.1} parent=23 // pred_check_branch
          %189 = sbr.rel (%p187) target = $region28
        $region27: #{tpu_custom_call.1} parent=23 // pred_region
          %s190 = sand.u32 %s47, 1
          %s191 = scalar_lea.sflag [#allocation4], %s190
          %s192 = sand.u32 %s47, 1
          %s193 = smul.addr %s192, 4
          %s194 = scalar_lea.vmem [#allocation3], %s193
          %s196 = ssub.s32 64, 64
          %197 = vsyncadd %s191, %s196
          %s198 = sadd.s32 %s25, %s23
          %s199 = smul.addr %s198, 64
          %s200 = scalar_lea.hbm %s0, %s199
          %s202 = sshll.u32 %s194, 4
          %s203 = int_to_ptr.vmem [resolvable:$true] %s202
          %205 = dma.hbm_to_vmem [thread:$0]  %s200, 64, %s203, %s191
        $region28: #{tpu_custom_call.1} parent=23 // pred_fallthru
          _
      $region24: #{tpu_custom_call.1} parent=5 // pred_fallthru
        _
      %p206 = scmp.le.s32.totalorder 1, %s16
      %p207 = scmp.lt.s32.totalorder %s16, 3
      %p208 = pnand %p206, %p207
      %p209 = pneg %p208
      // Predicated region
      $region29: #{tpu_custom_call.1} parent=5 // pred_check
        _
      $region30: #{tpu_custom_call.1} parent=5 // pred_check_branch
        %211 = sbr.rel (%p208) target = $region32
      $region31: #{tpu_custom_call.1} parent=5 // pred_region
        %s212 = ssub.s32 %s16, 1
        %s213 = sand.u32 %s50, 1
        %s214 = scalar_lea.sflag [#allocation4], %s213
        %s215 = sand.u32 %s50, 1
        %s216 = smul.addr %s215, 4
        %s217 = scalar_lea.vmem [#allocation3], %s216
        // Predicated region
        $region33: #{tpu_custom_call.1} parent=31 // pred_check
          %p218 = pneg %p63
        $region34: #{tpu_custom_call.1} parent=31 // pred_check_branch
          %220 = sbr.rel (%p218) target = $region36
        $region35: #{tpu_custom_call.1} parent=31 // pred_region
          %221 = dma.done %s214, 64
        $region36: #{tpu_custom_call.1} parent=31 // pred_fallthru
          _
        // Predicated region
        $region37: #{tpu_custom_call.1} parent=31 // pred_check
          %p222 = pneg %p91
        $region38: #{tpu_custom_call.1} parent=31 // pred_check_branch
          %224 = sbr.rel (%p222) target = $region40
        $region39: #{tpu_custom_call.1} parent=31 // pred_region
          %225 = dma.done [#allocation7], 256
        $region40: #{tpu_custom_call.1} parent=31 // pred_fallthru
          _
        %s226 = sand.u32 %s50, 1
        %s227 = scalar_lea.sflag [#allocation4], %s226
        %s228 = sand.u32 %s50, 1
        %s229 = smul.addr %s228, 4
        %s230 = scalar_lea.vmem [#allocation3], %s229
        %p231 = pneg %p63
        %p232 = pneg %p60
        %p233 = pneg %p91
        %p234 = pneg %p88
        %p235 = scmp.lt.s32.totalorder %s27, 0
        %s236 = scalar_select %p235, %s27, 0
        %s237 = scalar_lea.vmem %s2, %s236
        %p238 = pneg %p117
        %p239 = pneg %p114
        %p240 = pneg %p145
        %p241 = pneg %p142
        %s242 = sand.u32 %s132, 1
        %s243 = scalar_lea.sflag [#allocation5], %s242
        %s244 = sand.u32 %s132, 1
        %s245 = smul.addr %s244, 4
        %s246 = scalar_lea.vmem [#allocation8], %s245
        %s247 = smul.u32 4, %s28
        %p248 = scmp.lt.s32.totalorder %s27, 0
        %s249 = scalar_select %p248, %s27, 0
        %s250 = scalar_lea.vmem %s2, %s249
        %p252 = scmp.eq.s32.totalorder %s28, 0
        // Predicated region
        $region41: #{tpu_custom_call.1} parent=31 // pred_check
          %p253 = pneg %p252
        $region42: #{tpu_custom_call.1} parent=31 // pred_check_branch
          %255 = sbr.rel (%p253) target = $region44
        $region43: #{tpu_custom_call.1} parent=31 // pred_region
          %vm256 = vcmask 785408
          %257 = vst.msk [vmem:[#allocation2] sm:$0xff] %vm256, 0.0
        $region44: #{tpu_custom_call.1} parent=31 // pred_fallthru
          _
        %v258 = vld [vmem:[#allocation2] sm:$0xff]
        %v259 = vld [vmem:[%s217] sm:$0xf]
        %v260 = vld [vmem:[#allocation6] sm:$0xf]
        %v261 = vld [vmem:[#allocation6 + $0x4] sm:$0xf]
        %v262 = vld [vmem:[#allocation6 + $0x8] sm:$0xf]
        %v263 = vld [vmem:[#allocation6 + $0xc] sm:$0xf]
        %v268 = vunpack.c.l.b16 %v260
        %v269 = vunpack.c.l.b16 %v261
        %v270 = vunpack.c.l.b16 %v262
        %v271 = vunpack.c.l.b16 %v263
        %v272 = vpack.c.b16 %v269, %v268
        %v273 = vpack.c.b16 %v271, %v270
        %vm276 = vcmask 261120
        %v278 = vsel %vm276, %v259, 0
        %280 = vmatprep.subr.bf16.mxu0 0
        %281 = vmatpush1.bf16.msra.mxu0 %v272
        %282 = vmatprep.subr.bf16.mxu0 0
        %283 = vmatpush1.bf16.msra.mxu0 %v273
        %284 = vmatprep.subr.bf16.mxu0 0
        %285 = vmatpush1.bf16.msra.mxu0 0
        %286 = vmatprep.subr.bf16.mxu0 0
        %287 = vmatpush1.bf16.msra.mxu0 0
        %288 = vmatprep.subr.bf16.mxu0 0
        %289 = vmatpush1.bf16.msra.mxu0 0
        %290 = vmatprep.subr.bf16.mxu0 0
        %291 = vmatpush1.bf16.msra.mxu0 0
        %292 = vmatprep.subr.bf16.mxu0 0
        %293 = vmatpush1.bf16.msra.mxu0 0
        %294 = vmatprep.subr.bf16.mxu0 0
        %295 = vmatpush1.bf16.msra.mxu0 0
        %296 = vmatprep.subr.bf16.mxu0 0
        %297 = vmatpush1.bf16.msra.mxu0 0
        %298 = vmatprep.subr.bf16.mxu0 0
        %299 = vmatpush1.bf16.msra.mxu0 0
        %300 = vmatprep.subr.bf16.mxu0 0
        %301 = vmatpush1.bf16.msra.mxu0 0
        %302 = vmatprep.subr.bf16.mxu0 0
        %303 = vmatpush1.bf16.msra.mxu0 0
        %304 = vmatprep.subr.bf16.mxu0 0
        %305 = vmatpush1.bf16.msra.mxu0 0
        %306 = vmatprep.subr.bf16.mxu0 0
        %307 = vmatpush1.bf16.msra.mxu0 0
        %308 = vmatprep.subr.bf16.mxu0 0
        %309 = vmatpush1.bf16.msra.mxu0 0
        %310 = vmatprep.subr.bf16.mxu0 0
        %311 = vmatpush1.bf16.msra.mxu0 0
        %312 = vmatprep.mubr.bf16.mxu0 0
        %313 = vmatmul.mubr.bf16.gmra.mrb[0].mxu0 %v278
        %v314 = vpop.f32.mrb[0].mxu0
        %v315 = vadd.f32 0.0, %v314
        %v316 = vpop.f32.mrb[0].mxu0
        %v317 = vpop.f32.mrb[0].mxu0
        %v318 = vpop.f32.mrb[0].mxu0
        %319 = vdwg.mxu0
        %v320 = vadd.f32 %v258, %v315
        %vm321 = vcmask 785408
        %322 = vst.msk [vmem:[#allocation2] sm:$0xff] %vm321, %v320
        // Predicated region
        $region45: #{tpu_custom_call.1} parent=31 // pred_check
          %p323 = pneg %p252
        $region46: #{tpu_custom_call.1} parent=31 // pred_check_branch
          %325 = sbr.rel (%p323) target = $region48
        $region47: #{tpu_custom_call.1} parent=31 // pred_region
          %v326 = vld [vmem:[#allocation2] sm:$0xff]
          %v327 = vld [vmem:[%s250] sm:$0x1]
          %v329 = vlaneseq
          %v330 = vshrl.u32 %v329, 7
          %v331 = vsub.s32 0, %v330
          %v332 = vrot.slane %v327, %v331
          %v334 = vadd.f32 %v326, %v332
          %v335 = vpack.c.bf16 %v334, %v334
          %vm336 = vcmask 781312
          %337 = vst.msk [vmem:[%s246] sm:$0xf] %vm336, %v335
        $region48: #{tpu_custom_call.1} parent=31 // pred_fallthru
          _
        %s338 = sand.u32 %s132, 1
        %s339 = scalar_lea.sflag [#allocation5], %s338
        %s340 = sand.u32 %s132, 1
        %s341 = smul.addr %s340, 4
        %s342 = scalar_lea.vmem [#allocation8], %s341
        // Predicated region
        $region49: #{tpu_custom_call.1} parent=31 // pred_check
          %p343 = pneg %p142
        $region50: #{tpu_custom_call.1} parent=31 // pred_check_branch
          %345 = sbr.rel (%p343) target = $region52
        $region51: #{tpu_custom_call.1} parent=31 // pred_region
          %s347 = ssub.s32 64, 64
          %348 = vsyncadd %s339, %s347
          %s349 = sadd.s32 %s27, %s26
          %s350 = smul.addr %s349, 64
          %s351 = scalar_lea.hbm %s3, %s350
          %s353 = sshll.u32 %s342, 4
          %s354 = int_to_ptr.vmem [resolvable:$true] %s353
          %356 = dma.vmem_to_hbm [thread:$0]  %s354, 64, %s351, %s339
        $region52: #{tpu_custom_call.1} parent=31 // pred_fallthru
          _
      $region32: #{tpu_custom_call.1} parent=5 // pred_fallthru
        _
      %p357 = scmp.le.s32.totalorder 2, %s16
      // Predicated region
      $region53: #{tpu_custom_call.1} parent=5 // pred_check
        %p358 = pneg %p357
      $region54: #{tpu_custom_call.1} parent=5 // pred_check_branch
        %360 = sbr.rel (%p358) target = $region56
      $region55: #{tpu_custom_call.1} parent=5 // pred_region
        %s361 = ssub.s32 %s16, 2
        // Predicated region
        $region57: #{tpu_custom_call.1} parent=55 // pred_check
          %p362 = pneg %p148
        $region58: #{tpu_custom_call.1} parent=55 // pred_check_branch
          %364 = sbr.rel (%p362) target = $region60
        $region59: #{tpu_custom_call.1} parent=55 // pred_region
          %s365 = sand.u32 %s133, 1
          %s366 = scalar_lea.sflag [#allocation5], %s365
          %s367 = sand.u32 %s133, 1
          %s368 = smul.addr %s367, 4
          %s369 = scalar_lea.vmem [#allocation8], %s368
          %370 = dma.done %s366, 64
        $region60: #{tpu_custom_call.1} parent=55 // pred_fallthru
          _
      $region56: #{tpu_custom_call.1} parent=5 // pred_fallthru
        _
    $region6: #{tpu_custom_call.1} parent=1 // loop_footer
      %s20 = sadd.s32 1, %s16
    $region7: #{tpu_custom_call.1} parent=1 // loop_footer_branch
      %15 = sbr.rel target = $region3
    $region8: #{tpu_custom_call.1} parent=1 // loop_exit
      _
    %371 = vsyncpa [#allocation4], 1
    %s372 = scalar_lea.sflag [#allocation4], 1
    %373 = vsyncpa %s372, 1
    %374 = vsyncpa [#allocation7], 1
    %375 = vsyncpa [#allocation5], 1
    %s376 = scalar_lea.sflag [#allocation5], 1
    %377 = vsyncpa %s376, 1

</llo_original>
